<compile_context>
chip_gen: v7x
topology: tpu7x:2x2x1
jax: 0.10.0
libtpu: 0.0.40
codegen_flags: <defaults>
</compile_context>

<pallas_src>
import jax
import jax.numpy as jnp
from jax.experimental import pallas as pl
from jax.experimental.pallas import tpu as pltpu


# ---------------------------------------------------------------------------
# Kernels
# ---------------------------------------------------------------------------
def _erase_kernel(x_ref, y_ref, wx_ref, o_ref):
    # x_ref, y_ref, o_ref: (r_blk, d_blk);  wx_ref: (r_blk, 1), values in {0,0.5,1}
    x = x_ref[...].astype(jnp.float32)
    y = y_ref[...].astype(jnp.float32)
    w = wx_ref[...]                       # broadcasts over the lane (dim) axis
    o_ref[...] = (x * w + y * (1.0 - w)).astype(o_ref.dtype)


def _avg_kernel(x_ref, y_ref, o_ref):
    x = x_ref[...].astype(jnp.float32)
    y = y_ref[...].astype(jnp.float32)
    o_ref[...] = ((x + y) * 0.5).astype(o_ref.dtype)


# ---------------------------------------------------------------------------
# Tiling
# ---------------------------------------------------------------------------
def _round_up(v, m):
    return ((v + m - 1) // m) * m


def _pick_blocks(rows, dim, itemsize, target_block_bytes=2 << 20):
    """Pick (r_blk, d_blk, grid_r, grid_d): ~target_block_bytes per operand block.

    - d_blk == dim unless even an 8-row full-width slab exceeds the target
      (very wide dim), in which case dim is tiled in multiples of 128.
    - r_blk is a multiple of 8 (or the full row count).
    - The grid never collapses to a single step when rows >= 16, so both
      v7x TensorCores can be fed via dimension_semantics=("parallel",...).
    """
    if 8 * dim * itemsize <= target_block_bytes:
        d_blk = dim
    else:
        d_blk = max(128, (target_block_bytes // (8 * itemsize * 128)) * 128)

    max_rows = max(8, target_block_bytes // max(1, d_blk * itemsize))
    if rows <= max_rows:
        r_blk = rows                       # full extent: exempt from (8,128) rule
    else:
        r_blk = max(8, (max_rows // 8) * 8)

    grid_r = pl.cdiv(rows, r_blk)
    grid_d = pl.cdiv(dim, d_blk)
    if grid_r * grid_d == 1 and rows >= 16:
        # Split into (at least) 2 row blocks so both TensorCores get work.
        r_blk = _round_up(pl.cdiv(rows, 2), 8)
        grid_r = pl.cdiv(rows, r_blk)
    return r_blk, d_blk, grid_r, grid_d


_COMPILER_PARAMS = pltpu.CompilerParams(
    dimension_semantics=("parallel", "parallel"),
    vmem_limit_bytes=48 * 1024 * 1024,
)


# ---------------------------------------------------------------------------
# pallas_call wrappers
# ---------------------------------------------------------------------------
def _weighted_combine(xf, yf, wx):
    rows, dim = xf.shape
    r_blk, d_blk, grid_r, grid_d = _pick_blocks(rows, dim, xf.dtype.itemsize)
    return pl.pallas_call(
        _erase_kernel,
        out_shape=jax.ShapeDtypeStruct((rows, dim), xf.dtype),
        grid=(grid_r, grid_d),
        in_specs=[
            pl.BlockSpec((r_blk, d_blk), lambda ri, di: (ri, di)),
            pl.BlockSpec((r_blk, d_blk), lambda ri, di: (ri, di)),
            pl.BlockSpec((r_blk, 1), lambda ri, di: (ri, 0)),
        ],
        out_specs=pl.BlockSpec((r_blk, d_blk), lambda ri, di: (ri, di)),
        compiler_params=_COMPILER_PARAMS,
    )(xf, yf, wx)


def _average(xf, yf):
    rows, dim = xf.shape
    r_blk, d_blk, grid_r, grid_d = _pick_blocks(rows, dim, xf.dtype.itemsize)
    return pl.pallas_call(
        _avg_kernel,
        out_shape=jax.ShapeDtypeStruct((rows, dim), xf.dtype),
        grid=(grid_r, grid_d),
        in_specs=[
            pl.BlockSpec((r_blk, d_blk), lambda ri, di: (ri, di)),
            pl.BlockSpec((r_blk, d_blk), lambda ri, di: (ri, di)),
        ],
        out_specs=pl.BlockSpec((r_blk, d_blk), lambda ri, di: (ri, di)),
        compiler_params=_COMPILER_PARAMS,
    )(xf, yf)


# ---------------------------------------------------------------------------
# Public API (matches the PyTorch module's forward semantics)
# ---------------------------------------------------------------------------
def random_erase(x, y, *, drop_prob, training, key=None):
    assert x.ndim == y.ndim == 3
    assert x.shape == y.shape
    if drop_prob < 0.0 or drop_prob > 1.0:
        raise ValueError(
            f"drop probability has to be between 0 and 1, but got {drop_prob}")

    layer, bs, dim = x.shape
    rows = layer * bs
    xf = x.reshape(rows, dim)
    yf = y.reshape(rows, dim)

    if (not training) or drop_prob == 0.0:
        out = _average(xf, yf)
    else:
        if key is None:
            raise ValueError(
                "random_erase: a PRNG key is required when training with drop_prob > 0")
        survival_rate = 1.0 - drop_prob
        k_pos, k_src = jax.random.split(key)
        pos = jax.random.bernoulli(k_pos, survival_rate, (rows, 1))
        src = jax.random.bernoulli(k_src, 0.5, (rows, 1))
        noise_x = jnp.logical_or(pos, src)
        noise_y = jnp.logical_not(jnp.logical_xor(pos, noise_x))
        nx = noise_x.astype(jnp.float32)
        ny = noise_y.astype(jnp.float32)
        # nx + ny is always 1 or 2, so wx + wy == 1: only wx is streamed to the
        # kernel; the kernel uses y-weight (1 - wx).  Division is exact in f32.
        wx = nx / (nx + ny)
        out = _weighted_combine(xf, yf, wx)

    return out.reshape(layer, bs, dim)


# ---------------------------------------------------------------------------
# Self-test
# ---------------------------------------------------------------------------
if __name__ == "__main__":
    key = jax.random.PRNGKey(0)
    kx, ky, kmask = jax.random.split(key, 3)

    layer, bs, dim = 2, 8, 128
    x = jax.random.normal(kx, (layer, bs, dim), dtype=jnp.float32)
    y = jax.random.normal(ky, (layer, bs, dim), dtype=jnp.float32)

    # Training path (stochastic per-row masks).
    out_train = random_erase(x, y, drop_prob=0.3, training=True, key=kmask)
    out_train = jax.block_until_ready(out_train)

    # Each output row must equal x, y, or (x+y)/2 for that row.
    avg = (x + y) * 0.5
    ok_rows = True
    for l in range(layer):
        for b in range(bs):
            row = out_train[l, b]
            match = (bool(jnp.allclose(row, x[l, b], atol=1e-6)) or
                     bool(jnp.allclose(row, y[l, b], atol=1e-6)) or
                     bool(jnp.allclose(row, avg[l, b], atol=1e-6)))
            ok_rows = ok_rows and match

    # Eval path: exact average (dedicated no-weight kernel).
    out_eval = random_erase(x, y, drop_prob=0.3, training=False)
    out_eval = jax.block_until_ready(out_eval)
    ok_eval = bool(jnp.allclose(out_eval, avg, atol=1e-6))

    assert out_train.shape == x.shape and out_eval.shape == x.shape
    assert ok_rows and ok_eval
    print("KERNEL_OK")
</pallas_src>

<mosaic_0001>
module attributes {stable_mosaic.version = 11 : i64} {
  func.func @_erase_kernel(%arg0: i32, %arg1: i32, %arg2: memref<8x128xf32, #tpu.memory_space<vmem>>, %arg3: memref<8x128xf32, #tpu.memory_space<vmem>>, %arg4: memref<8x1xf32, #tpu.memory_space<vmem>>, %arg5: memref<8x128xf32, #tpu.memory_space<vmem>>) attributes {dimension_semantics = [#tpu.dimension_semantics<parallel>, #tpu.dimension_semantics<parallel>], iteration_bounds = array<i64: 2, 1>, scalar_prefetch = 0 : i64, scratch_operands = 0 : i64, tpu.core_type = #tpu.core_type<tc>, window_params = [{transform_indices = @transform_0, window_bounds = array<i64: 8, 128>}, {transform_indices = @transform_1, window_bounds = array<i64: 8, 128>}, {transform_indices = @transform_2, window_bounds = array<i64: 8, 1>}, {transform_indices = @transform_3, window_bounds = array<i64: 8, 128>}]} {
    %c0 = arith.constant 0 : index
    %c0_0 = arith.constant 0 : index
    %0 = vector.load %arg2[%c0, %c0_0] : memref<8x128xf32, #tpu.memory_space<vmem>>, vector<8x128xf32>
    %c0_1 = arith.constant 0 : index
    %c0_2 = arith.constant 0 : index
    %1 = vector.load %arg3[%c0_1, %c0_2] : memref<8x128xf32, #tpu.memory_space<vmem>>, vector<8x128xf32>
    %c0_3 = arith.constant 0 : index
    %c0_4 = arith.constant 0 : index
    %2 = vector.load %arg4[%c0_3, %c0_4] : memref<8x1xf32, #tpu.memory_space<vmem>>, vector<8x1xf32>
    %3 = vector.broadcast %2 : vector<8x1xf32> to vector<8x128xf32>
    %4 = arith.mulf %0, %3 : vector<8x128xf32>
    %cst = arith.constant 1.000000e+00 : f32
    %5 = vector.broadcast %cst : f32 to vector<8x1xf32>
    %6 = arith.subf %5, %2 : vector<8x1xf32>
    %7 = vector.broadcast %6 : vector<8x1xf32> to vector<8x128xf32>
    %8 = arith.mulf %1, %7 : vector<8x128xf32>
    %9 = arith.addf %4, %8 : vector<8x128xf32>
    %c0_5 = arith.constant 0 : index
    %c0_6 = arith.constant 0 : index
    %10 = vector.load %arg5[%c0_5, %c0_6] : memref<8x128xf32, #tpu.memory_space<vmem>>, vector<8x128xf32>
    tpu.vector_store %arg5[%c0_5, %c0_6], %9 {strides = array<i32>} : memref<8x128xf32, #tpu.memory_space<vmem>>, vector<8x128xf32>,
    return
  }
  func.func @transform_0(%arg0: i32, %arg1: i32) -> (i32, i32) {
    %c0_i32 = arith.constant 0 : i32
    return %arg0, %arg1 : i32, i32
  }
  func.func @transform_1(%arg0: i32, %arg1: i32) -> (i32, i32) {
    %c0_i32 = arith.constant 0 : i32
    return %arg0, %arg1 : i32, i32
  }
  func.func @transform_2(%arg0: i32, %arg1: i32) -> (i32, i32) {
    %c0_i32 = arith.constant 0 : i32
    %c0_i32_0 = arith.constant 0 : i32
    return %arg0, %c0_i32 : i32, i32
  }
  func.func @transform_3(%arg0: i32, %arg1: i32) -> (i32, i32) {
    %c0_i32 = arith.constant 0 : i32
    return %arg0, %arg1 : i32, i32
  }
}

</mosaic_0001>

<llo_original>
// kernel: tpu_custom_call.1
$region0: #{tpu_custom_call.1}
  #allocation0 [shape = 'u32[]', space=smem, size = 0x4, offset = 0x4, fixed_abs, tag = 'smem constant byte address 0x4 - core index']
  #allocation1 [shape = 'u32[144,128]{1,0:T(1,128)}', space=vmem, size = 0x12000, scoped, tag = 'internal scratch']
  %s0 = inlined_call_operand.vmem [shape: f32[16,128], index: 0, kind: input, shape index: {}]
  %s1 = inlined_call_operand.hbm [shape: f32[16,128], index: 1, kind: input, shape index: {}]
  %s2 = inlined_call_operand.vmem [shape: f32[16,1], index: 2, kind: input, shape index: {}]
  %s3 = inlined_call_operand.hbm [shape: f32[16,128], index: 3, kind: output, shape index: {}]
  %s4 = sld [smem:[#allocation0]]
  $region49: #{tpu_custom_call.1} parent=0
    _
  %s6 = ssub.s32 1, %s4
  %s7 = scalar_select 0, %s6, %s4
  $region1: #{tpu_custom_call.1} parent=0
    #allocation2 [shape = 'u8[8192]{0}', space=vmem, size = 0x2000, scoped, tag = 'input window, operand 1']
    #allocation3 [shape = 's32[2]{0}', space=sflag, size = 0x8, scoped, tag = 'scoped memory for tpu_custom_call.1']
    #allocation4 [shape = 's32[2]{0}', space=sflag, size = 0x8, scoped, tag = 'scoped memory for tpu_custom_call.1']
    #allocation5 [shape = 'u8[8192]{0}', space=vmem, size = 0x2000, scoped, tag = 'output window, operand 0']
    %8 = vsyncpa [#allocation3], 0
    %s9 = scalar_lea.sflag [#allocation3], 1
    %10 = vsyncpa %s9, 0
    %11 = vsyncpa [#allocation4], 0
    %s12 = scalar_lea.sflag [#allocation4], 1
    %13 = vsyncpa %s12, 0
    loop: start=0, step=1, limit=4
    $region2: #{tpu_custom_call.1} parent=1 // loop_pre_header
      _
    $region3: #{tpu_custom_call.1} parent=1 // loop_header
      %s15 = sphi 0, %s19
      %p16 = scmp.ge.s32.totalorder %s15, 4
      %s22 = sphi 0, %s34
      %s23 = sphi 0, %s30
      %s24 = sphi 0, %s22
      %s25 = sphi 0, %s23
      %s26 = sphi 0, %s24
      %s27 = sphi 0, %s25
      %s39 = sphi 0, %s41
      %s42 = sphi 0, %s39
      %s43 = sphi 0, %s42
      %s59 = sphi 0, %s43
      %s67 = sphi 0, %s69
      %s70 = sphi 0, %s67
      %s71 = sphi 0, %s70
      %s87 = sphi 0, %s71
      %s93 = sphi 0, %s95
      %s96 = sphi 0, %s93
      %s97 = sphi 0, %s96
      %s113 = sphi 0, %s97
      %s121 = sphi 0, %s123
      %s124 = sphi 0, %s121
      %s125 = sphi 0, %s124
      %s141 = sphi 0, %s125
    $region4: #{tpu_custom_call.1} parent=1 // loop_header_branch
      %18 = sbr.rel (%p16) target = $region8
    $region5: #{tpu_custom_call.1} parent=1 // loop_body
      %s20 = ssub.s32 %s15, 1
      %s21 = ssub.s32 %s15, 2
      %s28 = sadd.s32 1, %s23
      %p29 = scmp.ge.s32.totalorder %s28, 1
      %s30 = scalar_select %p29, 0, %s28
      %s31 = sadd.s32 1, %s22
      %s32 = scalar_select %p29, %s31, %s22
      %p33 = scmp.ge.s32.totalorder %s32, 2
      %s34 = scalar_select %p33, 0, %s32
      %s35 = ssub.s32 %s22, %s34
      %s36 = ssub.s32 %s23, %s30
      %s37 = sor.u32 %s35, %s36
      %p38 = scmp.eq.s32.totalorder %s37, 0
      %s40 = sadd.s32 %s39, 1
      %s41 = scalar_select %p38, %s39, %s40
      %p44 = pneg %p38
      %p45 = scmp.eq.s32.totalorder %s15, 1
      %p46 = por %p44, %p45
      %p47 = scmp.ne.s32.totalorder %s39, %s42
      %p48 = scmp.eq.s32.totalorder %s15, 0
      %p49 = por %p47, %p48
      %p50 = scmp.ne.s32.totalorder %s39, %s42
      %p51 = scmp.eq.s32.totalorder %s20, 1
      %p52 = por %p50, %p51
      %p53 = scmp.ne.s32.totalorder %s42, %s43
      %p54 = scmp.eq.s32.totalorder %s20, 0
      %p55 = por %p53, %p54
      %p56 = scmp.ne.s32.totalorder %s42, %s43
      %p57 = scmp.eq.s32.totalorder %s21, 1
      %p58 = por %p56, %p57
      %p60 = scmp.ne.s32.totalorder %s43, %s59
      %p61 = scmp.eq.s32.totalorder %s21, 0
      %p62 = por %p60, %p61
      %s63 = ssub.s32 %s22, %s34
      %s64 = ssub.s32 %s23, %s30
      %s65 = sor.u32 %s63, %s64
      %p66 = scmp.eq.s32.totalorder %s65, 0
      %s68 = sadd.s32 %s67, 1
      %s69 = scalar_select %p66, %s67, %s68
      %p72 = pneg %p66
      %p73 = scmp.eq.s32.totalorder %s15, 1
      %p74 = por %p72, %p73
      %p75 = scmp.ne.s32.totalorder %s67, %s70
      %p76 = scmp.eq.s32.totalorder %s15, 0
      %p77 = por %p75, %p76
      %p78 = scmp.ne.s32.totalorder %s67, %s70
      %p79 = scmp.eq.s32.totalorder %s20, 1
      %p80 = por %p78, %p79
      %p81 = scmp.ne.s32.totalorder %s70, %s71
      %p82 = scmp.eq.s32.totalorder %s20, 0
      %p83 = por %p81, %p82
      %p84 = scmp.ne.s32.totalorder %s70, %s71
      %p85 = scmp.eq.s32.totalorder %s21, 1
      %p86 = por %p84, %p85
      %p88 = scmp.ne.s32.totalorder %s71, %s87
      %p89 = scmp.eq.s32.totalorder %s21, 0
      %p90 = por %p88, %p89
      %s91 = ssub.s32 %s22, %s34
      %p92 = scmp.eq.s32.totalorder %s91, 0
      %s94 = sadd.s32 %s93, 1
      %s95 = scalar_select %p92, %s93, %s94
      %p98 = pneg %p92
      %p99 = scmp.eq.s32.totalorder %s15, 1
      %p100 = por %p98, %p99
      %p101 = scmp.ne.s32.totalorder %s93, %s96
      %p102 = scmp.eq.s32.totalorder %s15, 0
      %p103 = por %p101, %p102
      %p104 = scmp.ne.s32.totalorder %s93, %s96
      %p105 = scmp.eq.s32.totalorder %s20, 1
      %p106 = por %p104, %p105
      %p107 = scmp.ne.s32.totalorder %s96, %s97
      %p108 = scmp.eq.s32.totalorder %s20, 0
      %p109 = por %p107, %p108
      %p110 = scmp.ne.s32.totalorder %s96, %s97
      %p111 = scmp.eq.s32.totalorder %s21, 1
      %p112 = por %p110, %p111
      %p114 = scmp.ne.s32.totalorder %s97, %s113
      %p115 = scmp.eq.s32.totalorder %s21, 0
      %p116 = por %p114, %p115
      %s117 = ssub.s32 %s22, %s34
      %s118 = ssub.s32 %s23, %s30
      %s119 = sor.u32 %s117, %s118
      %p120 = scmp.eq.s32.totalorder %s119, 0
      %s122 = sadd.s32 %s121, 1
      %s123 = scalar_select %p120, %s121, %s122
      %p126 = pneg %p120
      %p127 = scmp.eq.s32.totalorder %s15, 1
      %p128 = por %p126, %p127
      %p129 = scmp.ne.s32.totalorder %s121, %s124
      %p130 = scmp.eq.s32.totalorder %s15, 0
      %p131 = por %p129, %p130
      %p132 = scmp.ne.s32.totalorder %s121, %s124
      %p133 = scmp.eq.s32.totalorder %s20, 1
      %p134 = por %p132, %p133
      %p135 = scmp.ne.s32.totalorder %s124, %s125
      %p136 = scmp.eq.s32.totalorder %s20, 0
      %p137 = por %p135, %p136
      %p138 = scmp.ne.s32.totalorder %s124, %s125
      %p139 = scmp.eq.s32.totalorder %s21, 1
      %p140 = por %p138, %p139
      %p142 = scmp.ne.s32.totalorder %s125, %s141
      %p143 = scmp.eq.s32.totalorder %s21, 0
      %p144 = por %p142, %p143
      %p145 = scmp.le.s32.totalorder 1, %s15
      %p146 = scmp.lt.s32.totalorder %s15, 3
      %p147 = pnand %p145, %p146
      %p148 = pneg %p147
      // Predicated region
      $region9: #{tpu_custom_call.1} parent=5 // pred_check
        _
      $region10: #{tpu_custom_call.1} parent=5 // pred_check_branch
        %150 = sbr.rel (%p147) target = $region12
      $region11: #{tpu_custom_call.1} parent=5 // pred_region
        %s151 = ssub.s32 %s15, 1
      $region12: #{tpu_custom_call.1} parent=5 // pred_fallthru
        _
      %p152 = scmp.lt.s32.totalorder %s15, 2
      // Predicated region
      $region13: #{tpu_custom_call.1} parent=5 // pred_check
        %p153 = pneg %p152
      $region14: #{tpu_custom_call.1} parent=5 // pred_check_branch
        %155 = sbr.rel (%p153) target = $region16
      $region15: #{tpu_custom_call.1} parent=5 // pred_region
        // Predicated region
        $region17: #{tpu_custom_call.1} parent=15 // pred_check
          %p156 = pneg %p49
        $region18: #{tpu_custom_call.1} parent=15 // pred_check_branch
          %158 = sbr.rel (%p156) target = $region20
        $region19: #{tpu_custom_call.1} parent=15 // pred_region
          %p159 = scmp.lt.s32.totalorder %s22, 1
          %s160 = scalar_select %p159, %s22, 1
          %p161 = scmp.lt.s32.totalorder %s23, 0
          %s162 = scalar_select %p161, %s23, 0
          %s163 = sadd.s32 %s162, %s160
          %s164 = smul.addr %s163, 8
          %s165 = scalar_lea.vmem %s0, %s164
        $region20: #{tpu_custom_call.1} parent=15 // pred_fallthru
          _
        // Predicated region
        $region21: #{tpu_custom_call.1} parent=15 // pred_check
          %p166 = pneg %p77
        $region22: #{tpu_custom_call.1} parent=15 // pred_check_branch
          %168 = sbr.rel (%p166) target = $region24
        $region23: #{tpu_custom_call.1} parent=15 // pred_region
          %s169 = sand.u32 %s67, 1
          %s170 = scalar_lea.sflag [#allocation3], %s169
          %s171 = sand.u32 %s67, 1
          %s172 = smul.addr %s171, 8
          %s173 = scalar_lea.vmem [#allocation2], %s172
          %s175 = ssub.s32 128, 128
          %176 = vsyncadd %s170, %s175
          %s177 = sadd.s32 %s23, %s22
          %s178 = smul.addr %s177, 128
          %s179 = scalar_lea.hbm %s1, %s178
          %s181 = sshll.u32 %s173, 4
          %s182 = int_to_ptr.vmem [resolvable:$true] %s181
          %184 = dma.hbm_to_vmem [thread:$0]  %s179, 128, %s182, %s170
        $region24: #{tpu_custom_call.1} parent=15 // pred_fallthru
          _
        // Predicated region
        $region25: #{tpu_custom_call.1} parent=15 // pred_check
          %p185 = pneg %p103
        $region26: #{tpu_custom_call.1} parent=15 // pred_check_branch
          %187 = sbr.rel (%p185) target = $region28
        $region27: #{tpu_custom_call.1} parent=15 // pred_region
          %p188 = scmp.lt.s32.totalorder %s22, 1
          %s189 = scalar_select %p188, %s22, 1
          %s190 = smul.addr %s189, 8
          %s191 = scalar_lea.vmem %s2, %s190
        $region28: #{tpu_custom_call.1} parent=15 // pred_fallthru
          _
      $region16: #{tpu_custom_call.1} parent=5 // pred_fallthru
        _
      %p192 = scmp.le.s32.totalorder 1, %s15
      %p193 = scmp.lt.s32.totalorder %s15, 3
      %p194 = pnand %p192, %p193
      %p195 = pneg %p194
      // Predicated region
      $region29: #{tpu_custom_call.1} parent=5 // pred_check
        _
      $region30: #{tpu_custom_call.1} parent=5 // pred_check_branch
        %197 = sbr.rel (%p194) target = $region32
      $region31: #{tpu_custom_call.1} parent=5 // pred_region
        %s198 = ssub.s32 %s15, 1
        %s199 = sand.u32 %s70, 1
        %s200 = scalar_lea.sflag [#allocation3], %s199
        %s201 = sand.u32 %s70, 1
        %s202 = smul.addr %s201, 8
        %s203 = scalar_lea.vmem [#allocation2], %s202
        // Predicated region
        $region33: #{tpu_custom_call.1} parent=31 // pred_check
          %p204 = pneg %p83
        $region34: #{tpu_custom_call.1} parent=31 // pred_check_branch
          %206 = sbr.rel (%p204) target = $region36
        $region35: #{tpu_custom_call.1} parent=31 // pred_region
          %207 = dma.done %s200, 128
        $region36: #{tpu_custom_call.1} parent=31 // pred_fallthru
          _
        %p208 = scmp.lt.s32.totalorder %s24, 1
        %s209 = scalar_select %p208, %s24, 1
        %p210 = scmp.lt.s32.totalorder %s25, 0
        %s211 = scalar_select %p210, %s25, 0
        %s212 = sadd.s32 %s211, %s209
        %s213 = smul.addr %s212, 8
        %s214 = scalar_lea.vmem %s0, %s213
        %p215 = pneg %p55
        %p216 = pneg %p52
        %s217 = sand.u32 %s70, 1
        %s218 = scalar_lea.sflag [#allocation3], %s217
        %s219 = sand.u32 %s70, 1
        %s220 = smul.addr %s219, 8
        %s221 = scalar_lea.vmem [#allocation2], %s220
        %p222 = pneg %p83
        %p223 = pneg %p80
        %p224 = scmp.lt.s32.totalorder %s24, 1
        %s225 = scalar_select %p224, %s24, 1
        %s226 = smul.addr %s225, 8
        %s227 = scalar_lea.vmem %s2, %s226
        %p228 = pneg %p109
        %p229 = pneg %p106
        %p230 = pneg %p137
        %p231 = pneg %p134
        %s232 = sand.u32 %s124, 1
        %s233 = scalar_lea.sflag [#allocation4], %s232
        %s234 = sand.u32 %s124, 1
        %s235 = smul.addr %s234, 8
        %s236 = scalar_lea.vmem [#allocation5], %s235
        %p237 = scmp.lt.s32.totalorder %s24, 1
        %s238 = scalar_select %p237, %s24, 1
        %p239 = scmp.lt.s32.totalorder %s25, 0
        %s240 = scalar_select %p239, %s25, 0
        %s241 = sadd.s32 %s240, %s238
        %s242 = smul.addr %s241, 8
        %s243 = scalar_lea.vmem %s0, %s242
        %p244 = scmp.lt.s32.totalorder %s24, 1
        %s245 = scalar_select %p244, %s24, 1
        %s246 = smul.addr %s245, 8
        %s247 = scalar_lea.vmem %s2, %s246
        %v248 = vld [vmem:[%s243] sm:$0xff]
        %v249 = vld [vmem:[%s203] sm:$0xff]
        %v250 = vld [vmem:[%s247] sm:$0xff]
        %252 = vset.pattern.permute.xlu0 0
        %253 = vperm.xlu0 %252, %v250
        %v254 = vpop.permute.xlu0 %253
        %v256 = vmul.f32 %v248, %v254
        %v257 = vsub.f32 1.0, %v250
        %259 = vset.pattern.permute.xlu0 0
        %260 = vperm.xlu0 %259, %v257
        %v261 = vpop.permute.xlu0 %260
        %v263 = vmul.f32 %v249, %v261
        %v264 = vadd.f32 %v256, %v263
        %265 = vst [vmem:[%s236] sm:$0xff] %v264
        %s266 = sand.u32 %s124, 1
        %s267 = scalar_lea.sflag [#allocation4], %s266
        %s268 = sand.u32 %s124, 1
        %s269 = smul.addr %s268, 8
        %s270 = scalar_lea.vmem [#allocation5], %s269
        // Predicated region
        $region37: #{tpu_custom_call.1} parent=31 // pred_check
          %p271 = pneg %p134
        $region38: #{tpu_custom_call.1} parent=31 // pred_check_branch
          %273 = sbr.rel (%p271) target = $region40
        $region39: #{tpu_custom_call.1} parent=31 // pred_region
          %s275 = ssub.s32 128, 128
          %276 = vsyncadd %s267, %s275
          %s277 = sadd.s32 %s25, %s24
          %s278 = smul.addr %s277, 128
          %s279 = scalar_lea.hbm %s3, %s278
          %s281 = sshll.u32 %s270, 4
          %s282 = int_to_ptr.vmem [resolvable:$true] %s281
          %284 = dma.vmem_to_hbm [thread:$0]  %s282, 128, %s279, %s267
        $region40: #{tpu_custom_call.1} parent=31 // pred_fallthru
          _
      $region32: #{tpu_custom_call.1} parent=5 // pred_fallthru
        _
      %p285 = scmp.le.s32.totalorder 2, %s15
      // Predicated region
      $region41: #{tpu_custom_call.1} parent=5 // pred_check
        %p286 = pneg %p285
      $region42: #{tpu_custom_call.1} parent=5 // pred_check_branch
        %288 = sbr.rel (%p286) target = $region44
      $region43: #{tpu_custom_call.1} parent=5 // pred_region
        %s289 = ssub.s32 %s15, 2
        // Predicated region
        $region45: #{tpu_custom_call.1} parent=43 // pred_check
          %p290 = pneg %p140
        $region46: #{tpu_custom_call.1} parent=43 // pred_check_branch
          %292 = sbr.rel (%p290) target = $region48
        $region47: #{tpu_custom_call.1} parent=43 // pred_region
          %s293 = sand.u32 %s125, 1
          %s294 = scalar_lea.sflag [#allocation4], %s293
          %s295 = sand.u32 %s125, 1
          %s296 = smul.addr %s295, 8
          %s297 = scalar_lea.vmem [#allocation5], %s296
          %298 = dma.done %s294, 128
        $region48: #{tpu_custom_call.1} parent=43 // pred_fallthru
          _
      $region44: #{tpu_custom_call.1} parent=5 // pred_fallthru
        _
    $region6: #{tpu_custom_call.1} parent=1 // loop_footer
      %s19 = sadd.s32 1, %s15
    $region7: #{tpu_custom_call.1} parent=1 // loop_footer_branch
      %14 = sbr.rel target = $region3
    $region8: #{tpu_custom_call.1} parent=1 // loop_exit
      _
    %299 = vsyncpa [#allocation3], 1
    %s300 = scalar_lea.sflag [#allocation3], 1
    %301 = vsyncpa %s300, 1
    %302 = vsyncpa [#allocation4], 1
    %s303 = scalar_lea.sflag [#allocation4], 1
    %304 = vsyncpa %s303, 1

</llo_original>
